<compile_context>
chip_gen: v6e
topology: v6e:2x2x1
jax: 0.10.0
libtpu: 0.0.40
codegen_flags: <defaults>
</compile_context>

<pallas_src>
import functools
import math

import jax
import jax.numpy as jnp
from jax.experimental import pallas as pl
from jax.experimental.pallas import tpu as pltpu


ACT_DTYPE = jnp.bfloat16                 # activation / MXU operand dtype
_MATMUL_X_TILE_BYTES = 4 * 1024 * 1024   # x-tile budget for the matmul M-tiling
_BN_FOLD_SCALE = 1.0 / math.sqrt(1.0 + 1e-5)   # fresh inference BN: gamma=1, var=1


@functools.lru_cache(maxsize=None)
def _vmem_limit():
    """96 MiB on 128 MiB-VMEM parts (v5e/v6e), 48 MiB otherwise (v7x has 64 MiB)."""
    default = 48 * 1024 * 1024
    try:
        info = pltpu.get_tpu_info()
        cap = getattr(info, "vmem_capacity_bytes", 0) or 0
    except Exception:
        return default
    if cap >= 100 * 1024 * 1024:
        return 96 * 1024 * 1024
    return default


def _row_tile(h, w, target_rows=512, max_rows=64):
    """Smallest divisor d of h with d*w >= target_rows (MXU-friendly M), capped."""
    divs = [d for d in range(1, h + 1) if h % d == 0]
    for d in divs:
        if d * w >= target_rows:
            if d <= max_rows:
                return d
            break
    cands = [d for d in divs if d <= max_rows]
    return cands[-1] if cands else h


# --------------------------------------------------------------------------- #
# Pallas kernels
# --------------------------------------------------------------------------- #
def _matmul_bias_kernel(x_ref, w_ref, shift_ref, o_ref, *, relu):
    """o = relu?( x @ w_foldedBN + shift )."""
    acc = jnp.dot(x_ref[...], w_ref[...], preferred_element_type=jnp.float32)
    acc = acc + shift_ref[...]
    if relu:
        acc = jnp.maximum(acc, 0.0)
    o_ref[...] = acc.astype(o_ref.dtype)


def _matmul_bias_res_kernel(x_ref, w_ref, shift_ref, res_ref, o_ref, *, relu):
    """Same with a fused residual-add epilogue (skip connection)."""
    acc = jnp.dot(x_ref[...], w_ref[...], preferred_element_type=jnp.float32)
    acc = acc + shift_ref[...] + res_ref[...].astype(jnp.float32)
    if relu:
        acc = jnp.maximum(acc, 0.0)
    o_ref[...] = acc.astype(o_ref.dtype)


def _sep_impl(x_ref, dw_ref, pw_ref, shift_ref, res_ref, o_ref, dwbuf, *,
              th, w, pre_relu, relu_out):
    """Fused SeparableConv2d: depthwise 3x3 (stride 1) + pointwise 1x1 + BN epilogue.

    x_ref:  (1, H+2, W+2, Cin) zero-padded image, resident per batch element.
    dwbuf:  (TH*W, Cin) bf16 scratch holding the depthwise output of this row tile.
    o_ref:  (1, 1, TH*W, Cout) output row tile (flattened rows).
    The per-row depthwise accumulator lives in vregs and is stored exactly once.
    """
    r = pl.program_id(1)
    base = r * th
    for h in range(th):
        acc = None
        for di in range(3):
            # One padded input row; pre-ReLU hoisted here (3x instead of 9x per elem).
            row = x_ref[0, pl.ds(base + h + di, 1), :, :][0]          # (W+2, Cin)
            if pre_relu:
                row = jnp.maximum(row, 0.0)   # relu(0)=0, so zero pad stays exact
            for dj in range(3):
                t = di * 3 + dj
                tap = row[dj:dj + w, :].astype(jnp.float32)           # (W, Cin)
                wk = dw_ref[t:t + 1, :].astype(jnp.float32)           # (1, Cin)
                term = tap * wk
                acc = term if acc is None else acc + term
        dwbuf[h * w:(h + 1) * w, :] = acc.astype(dwbuf.dtype)
    # Pointwise conv (BN scale folded into pw weights) + shift (+res) (+ReLU).
    acc2 = jnp.dot(dwbuf[...], pw_ref[...], preferred_element_type=jnp.float32)
    acc2 = acc2 + shift_ref[...]
    if res_ref is not None:
        acc2 = acc2 + res_ref[0, 0, :, :].astype(jnp.float32)
    if relu_out:
        acc2 = jnp.maximum(acc2, 0.0)
    o_ref[0, 0, :, :] = acc2.astype(o_ref.dtype)


def _sep_kernel(x_ref, dw_ref, pw_ref, shift_ref, o_ref, dwbuf, *,
                th, w, pre_relu, relu_out):
    _sep_impl(x_ref, dw_ref, pw_ref, shift_ref, None, o_ref, dwbuf,
              th=th, w=w, pre_relu=pre_relu, relu_out=relu_out)


def _sep_res_kernel(x_ref, dw_ref, pw_ref, shift_ref, res_ref, o_ref, dwbuf, *,
                    th, w, pre_relu, relu_out):
    _sep_impl(x_ref, dw_ref, pw_ref, shift_ref, res_ref, o_ref, dwbuf,
              th=th, w=w, pre_relu=pre_relu, relu_out=relu_out)


def _conv3x3s1_kernel(x_ref, w_ref, shift_ref, o_ref, pbuf, *, th, wo, cin, relu):
    """Full 3x3 conv, stride 1, no padding (+folded BN +ReLU) with in-kernel im2col.

    x_ref: (1, H, W, Cin) resident per batch element; pbuf: (TH*Wo, 9*Cin) bf16.
    """
    r = pl.program_id(1)
    base = r * th
    for h in range(th):
        for di in range(3):
            row = x_ref[0, pl.ds(base + h + di, 1), :, :][0]          # (W, Cin)
            for dj in range(3):
                t = di * 3 + dj
                pbuf[h * wo:(h + 1) * wo, t * cin:(t + 1) * cin] = row[dj:dj + wo, :]
    acc = jnp.dot(pbuf[...], w_ref[...], preferred_element_type=jnp.float32)
    acc = acc + shift_ref[...]
    if relu:
        acc = jnp.maximum(acc, 0.0)
    o_ref[0, 0, :, :] = acc.astype(o_ref.dtype)


def _maxpool_kernel(ee_ref, eo_ref, oe_ref, oo_ref, o_ref, *, to, wo, row_max):
    """MaxPool2d(3, 2, 1) on an even/odd row/col split; per-row running max in vregs,
    single store per output row (no output read-modify-write)."""
    r = pl.program_id(1)
    base = r * to
    for h in range(to):
        def tap(ref, roff, coff):
            rr = jnp.minimum(base + h + roff, row_max)   # clamp for partial last tile
            return ref[0, pl.ds(rr, 1), pl.ds(coff, wo), :][0]        # (Wo, C)
        m = tap(ee_ref, 0, 0)
        for ref, roff, coff in ((ee_ref, 0, 1), (ee_ref, 1, 0), (ee_ref, 1, 1),
                                (eo_ref, 0, 0), (eo_ref, 1, 0),
                                (oe_ref, 0, 0), (oe_ref, 0, 1),
                                (oo_ref, 0, 0)):
            m = jnp.maximum(m, tap(ref, roff, coff))
        o_ref[0, h, :, :] = m


def _gap_kernel(x_ref, o_ref):
    """Global average pool: (1, H*W, C) -> (1, C), mean in f32."""
    o_ref[...] = jnp.mean(x_ref[...].astype(jnp.float32), axis=1).astype(o_ref.dtype)


# --------------------------------------------------------------------------- #
# Wrappers around pallas_call
# --------------------------------------------------------------------------- #
def matmul_bias(x2, w, shift, *, relu=False, residual=None, out_dtype=None):
    """(M, K) @ (K, Cout) + shift (+ residual) (+ ReLU); BN scale pre-folded into w."""
    M, K = x2.shape
    Cout = w.shape[1]
    out_dtype = x2.dtype if out_dtype is None else out_dtype

    if M <= 512:
        TM = M
    else:
        TM = max(512, min(4096, (_MATMUL_X_TILE_BYTES // (2 * K)) // 8 * 8))
        TM = min(TM, M)
    TN = Cout
    for cand in (512, 256, 128):
        if Cout > cand and Cout % cand == 0:
            TN = cand
            break
    grid = (pl.cdiv(M, TM), Cout // TN)

    in_specs = [
        pl.BlockSpec((TM, K), lambda i, j: (i, 0)),
        pl.BlockSpec((K, TN), lambda i, j: (0, j)),
        pl.BlockSpec((1, TN), lambda i, j: (0, j)),
    ]
    args = [x2, w, shift]
    if residual is not None:
        in_specs.append(pl.BlockSpec((TM, TN), lambda i, j: (i, j)))
        args.append(residual)
        kernel = functools.partial(_matmul_bias_res_kernel, relu=relu)
    else:
        kernel = functools.partial(_matmul_bias_kernel, relu=relu)

    return pl.pallas_call(
        kernel,
        out_shape=jax.ShapeDtypeStruct((M, Cout), out_dtype),
        grid=grid,
        in_specs=in_specs,
        out_specs=pl.BlockSpec((TM, TN), lambda i, j: (i, j)),
        compiler_params=pltpu.CompilerParams(
            dimension_semantics=("parallel", "parallel"),
            vmem_limit_bytes=_vmem_limit()),
    )(*args)


def pointwise_bias(x_nhwc, w, shift, *, relu=False, residual=None):
    """1x1 conv (no bias) + folded BN shift (+ ReLU / fused residual add)."""
    N, H, W, Cin = x_nhwc.shape
    Cout = w.shape[1]
    x2 = x_nhwc.reshape(N * H * W, Cin)
    res2 = None if residual is None else residual.reshape(N * H * W, Cout)
    y2 = matmul_bias(x2, w, shift, relu=relu, residual=res2)
    return y2.reshape(N, H, W, Cout)


def separable(x_nhwc, dw, pw, shift, *, pre_relu, relu_out, residual=None):
    """Fused depthwise-3x3 + pointwise-1x1 + folded-BN (+ReLU/+residual)."""
    N, H, W, Cin = x_nhwc.shape
    Cout = pw.shape[1]
    TH = _row_tile(H, W)
    RT = H // TH
    xp = jnp.pad(x_nhwc, ((0, 0), (1, 1), (1, 1), (0, 0)))

    in_specs = [
        pl.BlockSpec((1, H + 2, W + 2, Cin), lambda n, r: (n, 0, 0, 0)),
        pl.BlockSpec((9, Cin), lambda n, r: (0, 0)),
        pl.BlockSpec((Cin, Cout), lambda n, r: (0, 0)),
        pl.BlockSpec((1, Cout), lambda n, r: (0, 0)),
    ]
    args = [xp, dw, pw, shift]
    if residual is not None:
        # TODO(synk): residual carry stays bf16 (standard); switch to f32 if the
        #             8 identity middle blocks show drift vs the f32 reference.
        in_specs.append(pl.BlockSpec((1, 1, TH * W, Cout), lambda n, r: (n, r, 0, 0)))
        args.append(residual.reshape(N, RT, TH * W, Cout))
        kernel = functools.partial(_sep_res_kernel, th=TH, w=W,
                                   pre_relu=pre_relu, relu_out=relu_out)
    else:
        kernel = functools.partial(_sep_kernel, th=TH, w=W,
                                   pre_relu=pre_relu, relu_out=relu_out)

    y = pl.pallas_call(
        kernel,
        out_shape=jax.ShapeDtypeStruct((N, RT, TH * W, Cout), x_nhwc.dtype),
        grid=(N, RT),
        in_specs=in_specs,
        out_specs=pl.BlockSpec((1, 1, TH * W, Cout), lambda n, r: (n, r, 0, 0)),
        scratch_shapes=[pltpu.VMEM((TH * W, Cin), ACT_DTYPE)],
        compiler_params=pltpu.CompilerParams(
            dimension_semantics=("parallel", "parallel"),
            vmem_limit_bytes=_vmem_limit()),
    )(*args)
    return y.reshape(N, H, W, Cout)


def conv3x3_s1_fused(x_nhwc, w2, shift, *, relu):
    """3x3 conv, stride 1, no padding + folded BN (+ReLU); im2col built in-kernel."""
    N, H, W, Cin = x_nhwc.shape
    Cout = w2.shape[1]
    Ho, Wo = H - 2, W - 2
    TH = _row_tile(Ho, Wo)
    RT = Ho // TH
    kernel = functools.partial(_conv3x3s1_kernel, th=TH, wo=Wo, cin=Cin, relu=relu)
    y = pl.pallas_call(
        kernel,
        out_shape=jax.ShapeDtypeStruct((N, RT, TH * Wo, Cout), x_nhwc.dtype),
        grid=(N, RT),
        in_specs=[
            pl.BlockSpec((1, H, W, Cin), lambda n, r: (n, 0, 0, 0)),
            pl.BlockSpec((9 * Cin, Cout), lambda n, r: (0, 0)),
            pl.BlockSpec((1, Cout), lambda n, r: (0, 0)),
        ],
        out_specs=pl.BlockSpec((1, 1, TH * Wo, Cout), lambda n, r: (n, r, 0, 0)),
        scratch_shapes=[pltpu.VMEM((TH * Wo, 9 * Cin), ACT_DTYPE)],
        compiler_params=pltpu.CompilerParams(
            dimension_semantics=("parallel", "parallel"),
            vmem_limit_bytes=_vmem_limit()),
    )(x_nhwc, w2, shift)
    return y.reshape(N, Ho, Wo, Cout)


def conv3x3_im2col(x_nhwc, w2, shift, *, stride, relu):
    """3x3 conv (no pad) via JAX im2col + matmul kernel.  Only used for the tiny
    stride-2 stem conv1 (Cin=3)."""
    # TODO(synk): fold the stride-2 taps into the kernel too (even/odd col split).
    N, H, W, Cin = x_nhwc.shape
    Cout = w2.shape[1]
    Ho = (H - 3) // stride + 1
    Wo = (W - 3) // stride + 1
    cols = []
    for di in range(3):
        for dj in range(3):
            cols.append(
                x_nhwc[:, di:di + stride * (Ho - 1) + 1:stride,
                       dj:dj + stride * (Wo - 1) + 1:stride, :])
    patches = jnp.concatenate(cols, axis=-1)          # (N, Ho, Wo, 9*Cin)
    x2 = patches.reshape(N * Ho * Wo, 9 * Cin)
    y2 = matmul_bias(x2, w2, shift, relu=relu)
    return y2.reshape(N, Ho, Wo, Cout)


def maxpool3x3_s2(x_nhwc):
    """MaxPool2d(kernel=3, stride=2, padding=1)."""
    N, H, W, C = x_nhwc.shape
    Ho = (H - 1) // 2 + 1
    Wo = (W - 1) // 2 + 1
    neg = jnp.finfo(x_nhwc.dtype).min
    pad_b = 2 * Ho + 1 - H
    pad_r = 2 * Wo + 1 - W
    xp = jnp.pad(x_nhwc, ((0, 0), (1, pad_b), (1, pad_r), (0, 0)),
                 constant_values=neg)
    # TODO(synk): replace the four even/odd HBM copies with strided pl.ds reads of a
    #             single padded input (pure HBM-traffic saving, biggest on v5e).
    x_ee = xp[:, 0::2, 0::2, :]            # (N, Ho+1, Wo+1, C) each
    x_eo = xp[:, 0::2, 1::2, :]
    x_oe = xp[:, 1::2, 0::2, :]
    x_oo = xp[:, 1::2, 1::2, :]

    TO = min(Ho, 8)
    RT = pl.cdiv(Ho, TO)
    kernel = functools.partial(_maxpool_kernel, to=TO, wo=Wo, row_max=Ho)
    hspec = pl.BlockSpec((1, Ho + 1, Wo + 1, C), lambda n, r: (n, 0, 0, 0))
    return pl.pallas_call(
        kernel,
        out_shape=jax.ShapeDtypeStruct((N, Ho, Wo, C), x_nhwc.dtype),
        grid=(N, RT),
        in_specs=[hspec, hspec, hspec, hspec],
        out_specs=pl.BlockSpec((1, TO, Wo, C), lambda n, r: (n, r, 0, 0)),
        compiler_params=pltpu.CompilerParams(
            dimension_semantics=("parallel", "parallel"),
            vmem_limit_bytes=_vmem_limit()),
    )(x_ee, x_eo, x_oe, x_oo)


def global_avg_pool(x_nhwc):
    N, H, W, C = x_nhwc.shape
    x3 = x_nhwc.reshape(N, H * W, C)
    return pl.pallas_call(
        _gap_kernel,
        out_shape=jax.ShapeDtypeStruct((N, C), x_nhwc.dtype),
        grid=(N,),
        in_specs=[pl.BlockSpec((1, H * W, C), lambda n: (n, 0, 0))],
        out_specs=pl.BlockSpec((1, C), lambda n: (n, 0)),
        compiler_params=pltpu.CompilerParams(
            dimension_semantics=("parallel",),
            vmem_limit_bytes=_vmem_limit()),
    )(x3)


# --------------------------------------------------------------------------- #
# Parameters (deterministic init; replaces the .pth checkpoint load)
# --------------------------------------------------------------------------- #
# (in, out, reps, stride, start_with_relu, grow_first) — matches Xception.__init__
BLOCK_CFGS = (
    (64, 128, 2, 2, False, True),
    (128, 256, 2, 2, True, True),
    (256, 728, 2, 2, True, True),
) + tuple((728, 728, 3, 1, True, True) for _ in range(8)) + (
    (728, 1024, 2, 2, True, False),
)

NUM_OUT_CLASSES = 2  # TransferModel(num_out_classes=2) replaces last_linear


def _sep_channels(cin, cout, reps, grow_first):
    seps = []
    filters = cin
    if grow_first:
        seps.append((cin, cout))
        filters = cout
    for _ in range(reps - 1):
        seps.append((filters, filters))
    if not grow_first:
        seps.append((cin, cout))
    return seps


def init_params(key):
    state = {"key": key}

    def nxt():
        state["key"], sub = jax.random.split(state["key"])
        return sub

    def randn(shape, fan_in):
        return jax.random.normal(nxt(), shape, jnp.float32) / math.sqrt(float(fan_in))

    def folded(shape, fan_in):
        # fresh inference-mode BN (gamma=1, var=1) folded into the conv weights
        return (randn(shape, fan_in) * _BN_FOLD_SCALE).astype(ACT_DTYPE)

    def shift(c):
        return jnp.zeros((1, c), jnp.float32)

    p = {}
    # stem (weights pre-flattened to (9*Cin, Cout) with BN scale folded in)
    p["conv1_w"] = (randn((3, 3, 3, 32), 27).reshape(27, 32)
                    * _BN_FOLD_SCALE).astype(ACT_DTYPE)
    p["conv1_shift"] = shift(32)
    p["conv2_w"] = (randn((3, 3, 32, 64), 288).reshape(288, 64)
                    * _BN_FOLD_SCALE).astype(ACT_DTYPE)
    p["conv2_shift"] = shift(64)

    # 12 Xception blocks
    blocks = []
    for (cin, cout, reps, stride, swr, gf) in BLOCK_CFGS:
        bp = {"stride": stride, "relu_first": swr, "seps": []}
        for (ci, co) in _sep_channels(cin, cout, reps, gf):
            bp["seps"].append({
                "dw": randn((9, ci), 9).astype(ACT_DTYPE),   # depthwise taps
                "pw": folded((ci, co), ci),                  # pointwise + BN scale
                "shift": shift(co),
            })
        if cout != cin or stride != 1:
            bp["skip_w"] = folded((cin, cout), cin)
            bp["skip_shift"] = shift(cout)
        blocks.append(bp)
    p["blocks"] = blocks

    # exit flow separable convs
    p["conv3_dw"] = randn((9, 1024), 9).astype(ACT_DTYPE)
    p["conv3_pw"] = folded((1024, 1536), 1024)
    p["conv3_shift"] = shift(1536)
    p["conv4_dw"] = randn((9, 1536), 9).astype(ACT_DTYPE)
    p["conv4_pw"] = folded((1536, 2048), 1536)
    p["conv4_shift"] = shift(2048)

    # TransferModel's new last_linear: Linear(2048, num_out_classes)
    p["fc_w"] = randn((2048, NUM_OUT_CLASSES), 2048).astype(ACT_DTYPE)
    p["fc_b"] = jax.random.normal(nxt(), (1, NUM_OUT_CLASSES), jnp.float32) * 0.01
    return p


# --------------------------------------------------------------------------- #
# Forward pass (== TransferModel.forward with modelchoice='xception')
# --------------------------------------------------------------------------- #
def _block_forward(x, bp):
    inp = x
    stride = bp["stride"]
    has_skip = "skip_w" in bp
    seps = bp["seps"]
    n = len(seps)
    h = x
    for i, sep in enumerate(seps):
        # Only the block's leading ReLU is a pre-activation on the separable path
        # (its un-ReLU'd input also feeds the skip branch); every other intra-block
        # ReLU is fused into the preceding separable epilogue.
        pre = bp["relu_first"] and i == 0
        fuse_res = (i == n - 1) and (not has_skip) and stride == 1
        h = separable(h, sep["dw"], sep["pw"], sep["shift"],
                      pre_relu=pre, relu_out=(i < n - 1),
                      residual=inp if fuse_res else None)
    if stride != 1:
        h = maxpool3x3_s2(h)
    if has_skip:
        # 1x1 conv with stride == strided subsample; residual add fused into its
        # matmul epilogue.
        s_in = inp[:, ::stride, ::stride, :]
        h = pointwise_bias(s_in, bp["skip_w"], bp["skip_shift"],
                           relu=False, residual=h)
    # identity-skip (stride-1) blocks had the residual fused into the last separable
    return h


def transfer_model_forward(params, x_nchw):
    # PyTorch feeds NCHW; kernels use NHWC bf16.
    x = jnp.transpose(x_nchw, (0, 2, 3, 1)).astype(ACT_DTYPE)

    # entry flow stem: conv1 -> bn1 -> relu -> conv2 -> bn2 -> relu
    x = conv3x3_im2col(x, params["conv1_w"], params["conv1_shift"],
                       stride=2, relu=True)
    x = conv3x3_s1_fused(x, params["conv2_w"], params["conv2_shift"], relu=True)

    # block1 ... block12
    for bp in params["blocks"]:
        x = _block_forward(x, bp)

    # exit flow: conv3(sep)+bn3 -> relu -> conv4(sep)+bn4 -> relu (from logits())
    x = separable(x, params["conv3_dw"], params["conv3_pw"], params["conv3_shift"],
                  pre_relu=False, relu_out=True)
    x = separable(x, params["conv4_dw"], params["conv4_pw"], params["conv4_shift"],
                  pre_relu=False, relu_out=True)

    # adaptive_avg_pool2d((1,1)) -> flatten -> last_linear(2048, 2)
    feat = global_avg_pool(x)  # (N, 2048)
    logits = matmul_bias(feat, params["fc_w"], params["fc_b"],
                         relu=False, out_dtype=jnp.float32)
    return logits


# TODO(synk): dropout branch of TransferModel (dropout=0.0 default) and the
#             pretrained-checkpoint load are intentionally omitted (inference,
#             deterministic in-script init).

if __name__ == "__main__":
    key = jax.random.PRNGKey(0)
    pkey, xkey = jax.random.split(key)
    params = init_params(pkey)

    # Small-but-valid Xception input: batch=2, 3 channels, 32x32 spatial (NCHW).
    x = jax.random.normal(xkey, (2, 3, 32, 32), jnp.float32)

    out = transfer_model_forward(params, x)
    out = jax.block_until_ready(out)

    assert out.shape == (2, NUM_OUT_CLASSES), out.shape
    assert bool(jnp.all(jnp.isfinite(out)))
    print("KERNEL_OK")
</pallas_src>

<mosaic_0001>
module attributes {stable_mosaic.version = 11 : i64} {
  func.func @_matmul_bias_kernel(%arg0: i32, %arg1: i32, %arg2: memref<450x27xbf16, #tpu.memory_space<vmem>>, %arg3: memref<27x32xbf16, #tpu.memory_space<vmem>>, %arg4: memref<1x32xf32, #tpu.memory_space<vmem>>, %arg5: memref<450x32xbf16, #tpu.memory_space<vmem>>) attributes {dimension_semantics = [#tpu.dimension_semantics<parallel>, #tpu.dimension_semantics<parallel>], iteration_bounds = array<i64: 1, 1>, scalar_prefetch = 0 : i64, scratch_operands = 0 : i64, tpu.core_type = #tpu.core_type<tc>, window_params = [{transform_indices = @transform_0, window_bounds = array<i64: 450, 27>}, {transform_indices = @transform_1, window_bounds = array<i64: 27, 32>}, {transform_indices = @transform_2, window_bounds = array<i64: 1, 32>}, {transform_indices = @transform_3, window_bounds = array<i64: 450, 32>}]} {
    %c0 = arith.constant 0 : index
    %c0_0 = arith.constant 0 : index
    %0 = vector.load %arg2[%c0, %c0_0] : memref<450x27xbf16, #tpu.memory_space<vmem>>, vector<450x27xbf16>
    %c0_1 = arith.constant 0 : index
    %c0_2 = arith.constant 0 : index
    %1 = vector.load %arg3[%c0_1, %c0_2] : memref<27x32xbf16, #tpu.memory_space<vmem>>, vector<27x32xbf16>
    %cst = arith.constant dense<0.000000e+00> : vector<450x32xf32>
    %2 = tpu.matmul %0, %1, %cst {dimension_numbers = #tpu.dot_dimension_numbers<[1], [0], [0], [1], [0, 0, 1, 1], [], []>} : vector<450x27xbf16>, vector<27x32xbf16>, vector<450x32xf32> -> vector<450x32xf32>
    %c0_3 = arith.constant 0 : index
    %c0_4 = arith.constant 0 : index
    %3 = vector.load %arg4[%c0_3, %c0_4] : memref<1x32xf32, #tpu.memory_space<vmem>>, vector<1x32xf32>
    %4 = vector.broadcast %3 : vector<1x32xf32> to vector<450x32xf32>
    %5 = arith.addf %2, %4 : vector<450x32xf32>
    %cst_5 = arith.constant 0.000000e+00 : f32
    %6 = vector.broadcast %cst_5 : f32 to vector<450x32xf32>
    %7 = arith.maximumf %5, %6 : vector<450x32xf32>
    %8 = arith.truncf %7 : vector<450x32xf32> to vector<450x32xbf16>
    %c0_6 = arith.constant 0 : index
    %c0_7 = arith.constant 0 : index
    %9 = vector.load %arg5[%c0_6, %c0_7] : memref<450x32xbf16, #tpu.memory_space<vmem>>, vector<450x32xbf16>
    tpu.vector_store %arg5[%c0_6, %c0_7], %8 {strides = array<i32>} : memref<450x32xbf16, #tpu.memory_space<vmem>>, vector<450x32xbf16>,
    return
  }
  func.func @transform_0(%arg0: i32, %arg1: i32) -> (i32, i32) {
    %c0_i32 = arith.constant 0 : i32
    %c0_i32_0 = arith.constant 0 : i32
    return %arg0, %c0_i32 : i32, i32
  }
  func.func @transform_1(%arg0: i32, %arg1: i32) -> (i32, i32) {
    %c0_i32 = arith.constant 0 : i32
    %c0_i32_0 = arith.constant 0 : i32
    return %c0_i32, %arg1 : i32, i32
  }
  func.func @transform_2(%arg0: i32, %arg1: i32) -> (i32, i32) {
    %c0_i32 = arith.constant 0 : i32
    %c0_i32_0 = arith.constant 0 : i32
    return %c0_i32, %arg1 : i32, i32
  }
  func.func @transform_3(%arg0: i32, %arg1: i32) -> (i32, i32) {
    %c0_i32 = arith.constant 0 : i32
    return %arg0, %arg1 : i32, i32
  }
}

</mosaic_0001>

<llo_original>
// kernel: tpu_custom_call.1
$region0: #{tpu_custom_call.1}
  #allocation0 [shape = 'u32[]', space=smem, size = 0x4, offset = 0x4, fixed_abs, tag = 'smem constant byte address 0x4 - core index']
  #allocation1 [shape = 'u32[144,128]{1,0:T(1,128)}', space=vmem, size = 0x12000, scoped, tag = 'internal scratch']
  %s0 = inlined_call_operand.vmem [shape: bf16[450,27], index: 0, kind: input, shape index: {}]
  %s1 = inlined_call_operand.vmem [shape: bf16[27,32], index: 1, kind: input, shape index: {}]
  %s2 = inlined_call_operand.vmem [shape: f32[1,32], index: 2, kind: input, shape index: {}]
  %s3 = inlined_call_operand.vmem [shape: bf16[450,32], index: 3, kind: output, shape index: {}]
  %s4 = sld [smem:[#allocation0]]
  $region22: #{tpu_custom_call.1} parent=0
    _
  %s6 = ssub.s32 1, %s4
  %s7 = scalar_select 0, %s6, %s4
  // Predicated region
  $region2: #{tpu_custom_call.1} parent=0 // pred_check
    _
  $region3: #{tpu_custom_call.1} parent=0 // pred_check_branch
    %9 = sbr.rel (0) target = $region5
  $region4: #{tpu_custom_call.1} parent=0 // pred_region
    _
  $region5: #{tpu_custom_call.1} parent=0 // pred_fallthru
    _
  // Predicated region
  $region6: #{tpu_custom_call.1} parent=0 // pred_check
    _
  $region7: #{tpu_custom_call.1} parent=0 // pred_check_branch
    %11 = sbr.rel (0) target = $region9
  $region8: #{tpu_custom_call.1} parent=0 // pred_region
    _
  $region9: #{tpu_custom_call.1} parent=0 // pred_fallthru
    _
  // Predicated region
  $region10: #{tpu_custom_call.1} parent=0 // pred_check
    _
  $region11: #{tpu_custom_call.1} parent=0 // pred_check_branch
    %13 = sbr.rel (0) target = $region13
  $region12: #{tpu_custom_call.1} parent=0 // pred_region
    _
  $region13: #{tpu_custom_call.1} parent=0 // pred_fallthru
    _
  %v15 = vld [vmem:[%s0] sm:$0xf]
  %v16 = vld [vmem:[%s0 + $0x4] sm:$0xf]
  %v17 = vld [vmem:[%s0 + $0x8] sm:$0xf]
  %v18 = vld [vmem:[%s0 + $0xc] sm:$0xf]
  %v19 = vld [vmem:[%s0 + $0x10] sm:$0xf]
  %v20 = vld [vmem:[%s0 + $0x14] sm:$0xf]
  %v21 = vld [vmem:[%s0 + $0x18] sm:$0xf]
  %v22 = vld [vmem:[%s0 + $0x1c] sm:$0xf]
  %v23 = vld [vmem:[%s0 + $0x20] sm:$0xf]
  %v24 = vld [vmem:[%s0 + $0x24] sm:$0xf]
  %v25 = vld [vmem:[%s0 + $0x28] sm:$0xf]
  %v26 = vld [vmem:[%s0 + $0x2c] sm:$0xf]
  %v27 = vld [vmem:[%s0 + $0x30] sm:$0xf]
  %v28 = vld [vmem:[%s0 + $0x34] sm:$0xf]
  %v29 = vld [vmem:[%s0 + $0x38] sm:$0xf]
  %v30 = vld [vmem:[%s0 + $0x3c] sm:$0xf]
  %v31 = vld [vmem:[%s0 + $0x40] sm:$0xf]
  %v32 = vld [vmem:[%s0 + $0x44] sm:$0xf]
  %v33 = vld [vmem:[%s0 + $0x48] sm:$0xf]
  %v34 = vld [vmem:[%s0 + $0x4c] sm:$0xf]
  %v35 = vld [vmem:[%s0 + $0x50] sm:$0xf]
  %v36 = vld [vmem:[%s0 + $0x54] sm:$0xf]
  %v37 = vld [vmem:[%s0 + $0x58] sm:$0xf]
  %v38 = vld [vmem:[%s0 + $0x5c] sm:$0xf]
  %v39 = vld [vmem:[%s0 + $0x60] sm:$0xf]
  %v40 = vld [vmem:[%s0 + $0x64] sm:$0xf]
  %v41 = vld [vmem:[%s0 + $0x68] sm:$0xf]
  %v42 = vld [vmem:[%s0 + $0x6c] sm:$0xf]
  %v43 = vld [vmem:[%s0 + $0x70] sm:$0xf]
  %v44 = vld [vmem:[%s0 + $0x74] sm:$0xf]
  %v45 = vld [vmem:[%s0 + $0x78] sm:$0xf]
  %v46 = vld [vmem:[%s0 + $0x7c] sm:$0xf]
  %v47 = vld [vmem:[%s0 + $0x80] sm:$0xf]
  %v48 = vld [vmem:[%s0 + $0x84] sm:$0xf]
  %v49 = vld [vmem:[%s0 + $0x88] sm:$0xf]
  %v50 = vld [vmem:[%s0 + $0x8c] sm:$0xf]
  %v51 = vld [vmem:[%s0 + $0x90] sm:$0xf]
  %v52 = vld [vmem:[%s0 + $0x94] sm:$0xf]
  %v53 = vld [vmem:[%s0 + $0x98] sm:$0xf]
  %v54 = vld [vmem:[%s0 + $0x9c] sm:$0xf]
  %v55 = vld [vmem:[%s0 + $0xa0] sm:$0xf]
  %v56 = vld [vmem:[%s0 + $0xa4] sm:$0xf]
  %v57 = vld [vmem:[%s0 + $0xa8] sm:$0xf]
  %v58 = vld [vmem:[%s0 + $0xac] sm:$0xf]
  %v59 = vld [vmem:[%s0 + $0xb0] sm:$0xf]
  %v60 = vld [vmem:[%s0 + $0xb4] sm:$0xf]
  %v61 = vld [vmem:[%s0 + $0xb8] sm:$0xf]
  %v62 = vld [vmem:[%s0 + $0xbc] sm:$0xf]
  %v63 = vld [vmem:[%s0 + $0xc0] sm:$0xf]
  %v64 = vld [vmem:[%s0 + $0xc4] sm:$0xf]
  %v65 = vld [vmem:[%s0 + $0xc8] sm:$0xf]
  %v66 = vld [vmem:[%s0 + $0xcc] sm:$0xf]
  %v67 = vld [vmem:[%s0 + $0xd0] sm:$0xf]
  %v68 = vld [vmem:[%s0 + $0xd4] sm:$0xf]
  %v69 = vld [vmem:[%s0 + $0xd8] sm:$0xf]
  %v70 = vld [vmem:[%s0 + $0xdc] sm:$0xf]
  %v71 = vld [vmem:[%s0 + $0xe0] sm:$0x1]
  %v72 = vld [vmem:[%s1] sm:$0xf]
  %v73 = vld [vmem:[%s1 + $0x4] sm:$0xf]
  %v74 = vld [vmem:[%s1 + $0x8] sm:$0xf]
  %v75 = vld [vmem:[%s1 + $0xc] sm:$0x3]
  %v76 = vld [vmem:[%s2] sm:$0x1]
  %v78 = vlaneseq
  %v79 = vshrl.u32 %v78, 7
  %v80 = vsub.s32 0, %v79
  %v81 = vrot.slane %v76, %v80
  %v140 = vunpack.c.l.b16 %v15
  %v141 = vunpack.c.l.b16 %v16
  %v142 = vunpack.c.l.b16 %v17
  %v143 = vunpack.c.l.b16 %v18
  %v144 = vunpack.c.l.b16 %v19
  %v145 = vunpack.c.l.b16 %v20
  %v146 = vunpack.c.l.b16 %v21
  %v147 = vunpack.c.l.b16 %v22
  %v148 = vunpack.c.l.b16 %v23
  %v149 = vunpack.c.l.b16 %v24
  %v150 = vunpack.c.l.b16 %v25
  %v151 = vunpack.c.l.b16 %v26
  %v152 = vunpack.c.l.b16 %v27
  %v153 = vunpack.c.l.b16 %v28
  %v154 = vunpack.c.l.b16 %v29
  %v155 = vunpack.c.l.b16 %v30
  %v156 = vunpack.c.l.b16 %v31
  %v157 = vunpack.c.l.b16 %v32
  %v158 = vunpack.c.l.b16 %v33
  %v159 = vunpack.c.l.b16 %v34
  %v160 = vunpack.c.l.b16 %v35
  %v161 = vunpack.c.l.b16 %v36
  %v162 = vunpack.c.l.b16 %v37
  %v163 = vunpack.c.l.b16 %v38
  %v164 = vunpack.c.l.b16 %v39
  %v165 = vunpack.c.l.b16 %v40
  %v166 = vunpack.c.l.b16 %v41
  %v167 = vunpack.c.l.b16 %v42
  %v168 = vunpack.c.l.b16 %v43
  %v169 = vunpack.c.l.b16 %v44
  %v170 = vunpack.c.l.b16 %v45
  %v171 = vunpack.c.l.b16 %v46
  %v172 = vunpack.c.l.b16 %v47
  %v173 = vunpack.c.l.b16 %v48
  %v174 = vunpack.c.l.b16 %v49
  %v175 = vunpack.c.l.b16 %v50
  %v176 = vunpack.c.l.b16 %v51
  %v177 = vunpack.c.l.b16 %v52
  %v178 = vunpack.c.l.b16 %v53
  %v179 = vunpack.c.l.b16 %v54
  %v180 = vunpack.c.l.b16 %v55
  %v181 = vunpack.c.l.b16 %v56
  %v182 = vunpack.c.l.b16 %v57
  %v183 = vunpack.c.l.b16 %v58
  %v184 = vunpack.c.l.b16 %v59
  %v185 = vunpack.c.l.b16 %v60
  %v186 = vunpack.c.l.b16 %v61
  %v187 = vunpack.c.l.b16 %v62
  %v188 = vunpack.c.l.b16 %v63
  %v189 = vunpack.c.l.b16 %v64
  %v190 = vunpack.c.l.b16 %v65
  %v191 = vunpack.c.l.b16 %v66
  %v192 = vunpack.c.l.b16 %v67
  %v193 = vunpack.c.l.b16 %v68
  %v194 = vunpack.c.l.b16 %v69
  %v195 = vunpack.c.l.b16 %v70
  %v196 = vunpack.c.l.b16 %v71
  %v197 = vpack.c.b16 %v141, %v140
  %v198 = vpack.c.b16 %v143, %v142
  %v199 = vpack.c.b16 %v145, %v144
  %v200 = vpack.c.b16 %v147, %v146
  %v201 = vpack.c.b16 %v149, %v148
  %v202 = vpack.c.b16 %v151, %v150
  %v203 = vpack.c.b16 %v153, %v152
  %v204 = vpack.c.b16 %v155, %v154
  %v205 = vpack.c.b16 %v157, %v156
  %v206 = vpack.c.b16 %v159, %v158
  %v207 = vpack.c.b16 %v161, %v160
  %v208 = vpack.c.b16 %v163, %v162
  %v209 = vpack.c.b16 %v165, %v164
  %v210 = vpack.c.b16 %v167, %v166
  %v211 = vpack.c.b16 %v169, %v168
  %v212 = vpack.c.b16 %v171, %v170
  %v213 = vpack.c.b16 %v173, %v172
  %v214 = vpack.c.b16 %v175, %v174
  %v215 = vpack.c.b16 %v177, %v176
  %v216 = vpack.c.b16 %v179, %v178
  %v217 = vpack.c.b16 %v181, %v180
  %v218 = vpack.c.b16 %v183, %v182
  %v219 = vpack.c.b16 %v185, %v184
  %v220 = vpack.c.b16 %v187, %v186
  %v221 = vpack.c.b16 %v189, %v188
  %v222 = vpack.c.b16 %v191, %v190
  %v223 = vpack.c.b16 %v193, %v192
  %v224 = vpack.c.b16 %v195, %v194
  %v225 = vpack.c.b16 %v196, %v196
  %v230 = vunpack.c.l.b16 %v72
  %v231 = vunpack.c.l.b16 %v73
  %v232 = vunpack.c.l.b16 %v74
  %v233 = vunpack.c.l.b16 %v75
  %v234 = vpack.c.b16 %v231, %v230
  %v235 = vpack.c.b16 %v233, %v232
  %vm237 = vcmask 220160
  %v239 = vsel %vm237, %v197, 0
  %v242 = vsel %vm237, %v198, 0
  %v245 = vsel %vm237, %v199, 0
  %v248 = vsel %vm237, %v200, 0
  %v251 = vsel %vm237, %v201, 0
  %v254 = vsel %vm237, %v202, 0
  %v257 = vsel %vm237, %v203, 0
  %v260 = vsel %vm237, %v204, 0
  %v263 = vsel %vm237, %v205, 0
  %v266 = vsel %vm237, %v206, 0
  %v269 = vsel %vm237, %v207, 0
  %v272 = vsel %vm237, %v208, 0
  %v275 = vsel %vm237, %v209, 0
  %v278 = vsel %vm237, %v210, 0
  %v281 = vsel %vm237, %v211, 0
  %v284 = vsel %vm237, %v212, 0
  %v287 = vsel %vm237, %v213, 0
  %v290 = vsel %vm237, %v214, 0
  %v293 = vsel %vm237, %v215, 0
  %v296 = vsel %vm237, %v216, 0
  %v299 = vsel %vm237, %v217, 0
  %v302 = vsel %vm237, %v218, 0
  %v305 = vsel %vm237, %v219, 0
  %v308 = vsel %vm237, %v220, 0
  %v311 = vsel %vm237, %v221, 0
  %v314 = vsel %vm237, %v222, 0
  %v317 = vsel %vm237, %v223, 0
  %v320 = vsel %vm237, %v224, 0
  %v323 = vsel %vm237, %v225, 0
  %vm325 = vcmask 1044480
  %vm326 = vcmask 1045504
  %v327 = vsel %vm325, 4294967295, 65535
  %v328 = vsel %vm326, %v327, 0
  %v330 = vand.u32 %v235, %v328
  %332 = vmatprep.subr.bf16.mxu0 0
  %333 = vmatpush1.bf16.msra.mxu0 0
  %334 = vmatprep.subr.bf16.mxu0 0
  %335 = vmatpush1.bf16.msra.mxu0 0
  %336 = vmatprep.subr.bf16.mxu0 0
  %337 = vmatpush1.bf16.msra.mxu0 0
  %338 = vmatprep.subr.bf16.mxu0 0
  %339 = vmatpush1.bf16.msra.mxu0 0
  %340 = vmatprep.subr.bf16.mxu0 0
  %341 = vmatpush1.bf16.msra.mxu0 0
  %342 = vmatprep.subr.bf16.mxu0 0
  %343 = vmatpush1.bf16.msra.mxu0 0
  %344 = vmatprep.subr.bf16.mxu0 0
  %345 = vmatpush1.bf16.msra.mxu0 %v330
  %346 = vmatprep.subr.bf16.mxu0 0
  %347 = vmatpush1.bf16.msra.mxu0 %v234
  %348 = vmatprep.subr.bf16.mxu0 0
  %349 = vmatpush2.bf16.msra.mxu0 0
  %350 = vmatprep.subr.bf16.mxu0 0
  %351 = vmatpush2.bf16.msra.mxu0 0
  %352 = vmatprep.subr.bf16.mxu0 0
  %353 = vmatpush2.bf16.msra.mxu0 0
  %354 = vmatprep.subr.bf16.mxu0 0
  %355 = vmatpush2.bf16.msra.mxu0 0
  %356 = vmatprep.subr.bf16.mxu0 0
  %357 = vmatpush2.bf16.msra.mxu0 0
  %358 = vmatprep.subr.bf16.mxu0 0
  %359 = vmatpush2.bf16.msra.mxu0 0
  %360 = vmatprep.subr.bf16.mxu0 0
  %361 = vmatpush2.bf16.msra.mxu0 0
  %362 = vmatprep.subr.bf16.mxu0 0
  %363 = vmatpush2.bf16.msra.mxu0 0
  %364 = vmatprep.mubr.bf16.mxu0 0
  %365 = vmatmul.mubr.bf16.gmra.mxu0 %v239
  %v366 = vpop.f32.mrf.mxu0
  %v367 = vadd.f32 %v81, %v366
  %v368 = vpop.f32.mrf.mxu0
  %v369 = vpop.f32.mrf.mxu0
  %v370 = vadd.f32 %v81, %v369
  %v371 = vpop.f32.mrf.mxu0
  %372 = vmatprep.mubr.bf16.mxu0 0
  %373 = vmatmul.mubr.bf16.gmra.mxu0 %v242
  %v374 = vpop.f32.mrf.mxu0
  %v375 = vadd.f32 %v81, %v374
  %v376 = vpop.f32.mrf.mxu0
  %v377 = vpop.f32.mrf.mxu0
  %v378 = vadd.f32 %v81, %v377
  %v379 = vpop.f32.mrf.mxu0
  %380 = vmatprep.mubr.bf16.mxu0 0
  %381 = vmatmul.mubr.bf16.gmra.mxu0 %v245
  %v382 = vpop.f32.mrf.mxu0
  %v383 = vadd.f32 %v81, %v382
  %v384 = vpop.f32.mrf.mxu0
  %v385 = vpop.f32.mrf.mxu0
  %v386 = vadd.f32 %v81, %v385
  %v387 = vpop.f32.mrf.mxu0
  %388 = vmatprep.mubr.bf16.mxu0 0
  %389 = vmatmul.mubr.bf16.gmra.mxu0 %v248
  %v390 = vpop.f32.mrf.mxu0
  %v391 = vadd.f32 %v81, %v390
  %v392 = vpop.f32.mrf.mxu0
  %v393 = vpop.f32.mrf.mxu0
  %v394 = vadd.f32 %v81, %v393
  %v395 = vpop.f32.mrf.mxu0
  %396 = vmatprep.mubr.bf16.mxu0 0
  %397 = vmatmul.mubr.bf16.gmra.mxu0 %v251
  %v398 = vpop.f32.mrf.mxu0
  %v399 = vadd.f32 %v81, %v398
  %v400 = vpop.f32.mrf.mxu0
  %v401 = vpop.f32.mrf.mxu0
  %v402 = vadd.f32 %v81, %v401
  %v403 = vpop.f32.mrf.mxu0
  %404 = vmatprep.mubr.bf16.mxu0 0
  %405 = vmatmul.mubr.bf16.gmra.mxu0 %v254
  %v406 = vpop.f32.mrf.mxu0
  %v407 = vadd.f32 %v81, %v406
  %v408 = vpop.f32.mrf.mxu0
  %v409 = vpop.f32.mrf.mxu0
  %v410 = vadd.f32 %v81, %v409
  %v411 = vpop.f32.mrf.mxu0
  %412 = vmatprep.mubr.bf16.mxu0 0
  %413 = vmatmul.mubr.bf16.gmra.mxu0 %v257
  %v414 = vpop.f32.mrf.mxu0
  %v415 = vadd.f32 %v81, %v414
  %v416 = vpop.f32.mrf.mxu0
  %v417 = vpop.f32.mrf.mxu0
  %v418 = vadd.f32 %v81, %v417
  %v419 = vpop.f32.mrf.mxu0
  %420 = vmatprep.mubr.bf16.mxu0 0
  %421 = vmatmul.mubr.bf16.gmra.mxu0 %v260
  %v422 = vpop.f32.mrf.mxu0
  %v423 = vadd.f32 %v81, %v422
  %v424 = vpop.f32.mrf.mxu0
  %v425 = vpop.f32.mrf.mxu0
  %v426 = vadd.f32 %v81, %v425
  %v427 = vpop.f32.mrf.mxu0
  %428 = vmatprep.mubr.bf16.mxu0 0
  %429 = vmatmul.mubr.bf16.gmra.mxu0 %v263
  %v430 = vpop.f32.mrf.mxu0
  %v431 = vadd.f32 %v81, %v430
  %v432 = vpop.f32.mrf.mxu0
  %v433 = vpop.f32.mrf.mxu0
  %v434 = vadd.f32 %v81, %v433
  %v435 = vpop.f32.mrf.mxu0
  %436 = vmatprep.mubr.bf16.mxu0 0
  %437 = vmatmul.mubr.bf16.gmra.mxu0 %v266
  %v438 = vpop.f32.mrf.mxu0
  %v439 = vadd.f32 %v81, %v438
  %v440 = vpop.f32.mrf.mxu0
  %v441 = vpop.f32.mrf.mxu0
  %v442 = vadd.f32 %v81, %v441
  %v443 = vpop.f32.mrf.mxu0
  %444 = vmatprep.mubr.bf16.mxu0 0
  %445 = vmatmul.mubr.bf16.gmra.mxu0 %v269
  %v446 = vpop.f32.mrf.mxu0
  %v447 = vadd.f32 %v81, %v446
  %v448 = vpop.f32.mrf.mxu0
  %v449 = vpop.f32.mrf.mxu0
  %v450 = vadd.f32 %v81, %v449
  %v451 = vpop.f32.mrf.mxu0
  %452 = vmatprep.mubr.bf16.mxu0 0
  %453 = vmatmul.mubr.bf16.gmra.mxu0 %v272
  %v454 = vpop.f32.mrf.mxu0
  %v455 = vadd.f32 %v81, %v454
  %v456 = vpop.f32.mrf.mxu0
  %v457 = vpop.f32.mrf.mxu0
  %v458 = vadd.f32 %v81, %v457
  %v459 = vpop.f32.mrf.mxu0
  %460 = vmatprep.mubr.bf16.mxu0 0
  %461 = vmatmul.mubr.bf16.gmra.mxu0 %v275
  %v462 = vpop.f32.mrf.mxu0
  %v463 = vadd.f32 %v81, %v462
  %v464 = vpop.f32.mrf.mxu0
  %v465 = vpop.f32.mrf.mxu0
  %v466 = vadd.f32 %v81, %v465
  %v467 = vpop.f32.mrf.mxu0
  %468 = vmatprep.mubr.bf16.mxu0 0
  %469 = vmatmul.mubr.bf16.gmra.mxu0 %v278
  %v470 = vpop.f32.mrf.mxu0
  %v471 = vadd.f32 %v81, %v470
  %v472 = vpop.f32.mrf.mxu0
  %v473 = vpop.f32.mrf.mxu0
  %v474 = vadd.f32 %v81, %v473
  %v475 = vpop.f32.mrf.mxu0
  %476 = vmatprep.mubr.bf16.mxu0 0
  %477 = vmatmul.mubr.bf16.gmra.mxu0 %v281
  %v478 = vpop.f32.mrf.mxu0
  %v479 = vadd.f32 %v81, %v478
  %v480 = vpop.f32.mrf.mxu0
  %v481 = vpop.f32.mrf.mxu0
  %v482 = vadd.f32 %v81, %v481
  %v483 = vpop.f32.mrf.mxu0
  %484 = vmatprep.mubr.bf16.mxu0 0
  %485 = vmatmul.mubr.bf16.gmra.mxu0 %v284
  %v486 = vpop.f32.mrf.mxu0
  %v487 = vadd.f32 %v81, %v486
  %v488 = vpop.f32.mrf.mxu0
  %v489 = vpop.f32.mrf.mxu0
  %v490 = vadd.f32 %v81, %v489
  %v491 = vpop.f32.mrf.mxu0
  %492 = vmatprep.mubr.bf16.mxu0 0
  %493 = vmatmul.mubr.bf16.gmra.mxu0 %v287
  %v494 = vpop.f32.mrf.mxu0
  %v495 = vadd.f32 %v81, %v494
  %v496 = vpop.f32.mrf.mxu0
  %v497 = vpop.f32.mrf.mxu0
  %v498 = vadd.f32 %v81, %v497
  %v499 = vpop.f32.mrf.mxu0
  %500 = vmatprep.mubr.bf16.mxu0 0
  %501 = vmatmul.mubr.bf16.gmra.mxu0 %v290
  %v502 = vpop.f32.mrf.mxu0
  %v503 = vadd.f32 %v81, %v502
  %v504 = vpop.f32.mrf.mxu0
  %v505 = vpop.f32.mrf.mxu0
  %v506 = vadd.f32 %v81, %v505
  %v507 = vpop.f32.mrf.mxu0
  %508 = vmatprep.mubr.bf16.mxu0 0
  %509 = vmatmul.mubr.bf16.gmra.mxu0 %v293
  %v510 = vpop.f32.mrf.mxu0
  %v511 = vadd.f32 %v81, %v510
  %v512 = vpop.f32.mrf.mxu0
  %v513 = vpop.f32.mrf.mxu0
  %v514 = vadd.f32 %v81, %v513
  %v515 = vpop.f32.mrf.mxu0
  %516 = vmatprep.mubr.bf16.mxu0 0
  %517 = vmatmul.mubr.bf16.gmra.mxu0 %v296
  %v518 = vpop.f32.mrf.mxu0
  %v519 = vadd.f32 %v81, %v518
  %v520 = vpop.f32.mrf.mxu0
  %v521 = vpop.f32.mrf.mxu0
  %v522 = vadd.f32 %v81, %v521
  %v523 = vpop.f32.mrf.mxu0
  %524 = vmatprep.mubr.bf16.mxu0 0
  %525 = vmatmul.mubr.bf16.gmra.mxu0 %v299
  %v526 = vpop.f32.mrf.mxu0
  %v527 = vadd.f32 %v81, %v526
  %v528 = vpop.f32.mrf.mxu0
  %v529 = vpop.f32.mrf.mxu0
  %v530 = vadd.f32 %v81, %v529
  %v531 = vpop.f32.mrf.mxu0
  %532 = vmatprep.mubr.bf16.mxu0 0
  %533 = vmatmul.mubr.bf16.gmra.mxu0 %v302
  %v534 = vpop.f32.mrf.mxu0
  %v535 = vadd.f32 %v81, %v534
  %v536 = vpop.f32.mrf.mxu0
  %v537 = vpop.f32.mrf.mxu0
  %v538 = vadd.f32 %v81, %v537
  %v539 = vpop.f32.mrf.mxu0
  %540 = vmatprep.mubr.bf16.mxu0 0
  %541 = vmatmul.mubr.bf16.gmra.mxu0 %v305
  %v542 = vpop.f32.mrf.mxu0
  %v543 = vadd.f32 %v81, %v542
  %v544 = vpop.f32.mrf.mxu0
  %v545 = vpop.f32.mrf.mxu0
  %v546 = vadd.f32 %v81, %v545
  %v547 = vpop.f32.mrf.mxu0
  %548 = vmatprep.mubr.bf16.mxu0 0
  %549 = vmatmul.mubr.bf16.gmra.mxu0 %v308
  %v550 = vpop.f32.mrf.mxu0
  %v551 = vadd.f32 %v81, %v550
  %v552 = vpop.f32.mrf.mxu0
  %v553 = vpop.f32.mrf.mxu0
  %v554 = vadd.f32 %v81, %v553
  %v555 = vpop.f32.mrf.mxu0
  %556 = vmatprep.mubr.bf16.mxu0 0
  %557 = vmatmul.mubr.bf16.gmra.mxu0 %v311
  %v558 = vpop.f32.mrf.mxu0
  %v559 = vadd.f32 %v81, %v558
  %v560 = vpop.f32.mrf.mxu0
  %v561 = vpop.f32.mrf.mxu0
  %v562 = vadd.f32 %v81, %v561
  %v563 = vpop.f32.mrf.mxu0
  %564 = vmatprep.mubr.bf16.mxu0 0
  %565 = vmatmul.mubr.bf16.gmra.mxu0 %v314
  %v566 = vpop.f32.mrf.mxu0
  %v567 = vadd.f32 %v81, %v566
  %v568 = vpop.f32.mrf.mxu0
  %v569 = vpop.f32.mrf.mxu0
  %v570 = vadd.f32 %v81, %v569
  %v571 = vpop.f32.mrf.mxu0
  %572 = vmatprep.mubr.bf16.mxu0 0
  %573 = vmatmul.mubr.bf16.gmra.mxu0 %v317
  %v574 = vpop.f32.mrf.mxu0
  %v575 = vadd.f32 %v81, %v574
  %v576 = vpop.f32.mrf.mxu0
  %v577 = vpop.f32.mrf.mxu0
  %v578 = vadd.f32 %v81, %v577
  %v579 = vpop.f32.mrf.mxu0
  %580 = vmatprep.mubr.bf16.mxu0 0
  %581 = vmatmul.mubr.bf16.gmra.mxu0 %v320
  %v582 = vpop.f32.mrf.mxu0
  %v583 = vadd.f32 %v81, %v582
  %v584 = vpop.f32.mrf.mxu0
  %v585 = vpop.f32.mrf.mxu0
  %v586 = vadd.f32 %v81, %v585
  %v587 = vpop.f32.mrf.mxu0
  %588 = vmatprep.mubr.bf16.mxu0 0
  %589 = vmatmul.mubr.bf16.gmra.mxu0 %v323
  %v590 = vpop.f32.mrf.mxu0
  %v591 = vadd.f32 %v81, %v590
  %v592 = vpop.f32.mrf.mxu0
  %v593 = vpop.f32.mrf.mxu0
  %v594 = vpop.f32.mrf.mxu0
  %595 = vdwg.mxu0
  %v596 = vmax.f32 %v367, 0.0
  %v597 = vmax.f32 %v370, 0.0
  %v598 = vmax.f32 %v375, 0.0
  %v599 = vmax.f32 %v378, 0.0
  %v600 = vmax.f32 %v383, 0.0
  %v601 = vmax.f32 %v386, 0.0
  %v602 = vmax.f32 %v391, 0.0
  %v603 = vmax.f32 %v394, 0.0
  %v604 = vmax.f32 %v399, 0.0
  %v605 = vmax.f32 %v402, 0.0
  %v606 = vmax.f32 %v407, 0.0
  %v607 = vmax.f32 %v410, 0.0
  %v608 = vmax.f32 %v415, 0.0
  %v609 = vmax.f32 %v418, 0.0
  %v610 = vmax.f32 %v423, 0.0
  %v611 = vmax.f32 %v426, 0.0
  %v612 = vmax.f32 %v431, 0.0
  %v613 = vmax.f32 %v434, 0.0
  %v614 = vmax.f32 %v439, 0.0
  %v615 = vmax.f32 %v442, 0.0
  %v616 = vmax.f32 %v447, 0.0
  %v617 = vmax.f32 %v450, 0.0
  %v618 = vmax.f32 %v455, 0.0
  %v619 = vmax.f32 %v458, 0.0
  %v620 = vmax.f32 %v463, 0.0
  %v621 = vmax.f32 %v466, 0.0
  %v622 = vmax.f32 %v471, 0.0
  %v623 = vmax.f32 %v474, 0.0
  %v624 = vmax.f32 %v479, 0.0
  %v625 = vmax.f32 %v482, 0.0
  %v626 = vmax.f32 %v487, 0.0
  %v627 = vmax.f32 %v490, 0.0
  %v628 = vmax.f32 %v495, 0.0
  %v629 = vmax.f32 %v498, 0.0
  %v630 = vmax.f32 %v503, 0.0
  %v631 = vmax.f32 %v506, 0.0
  %v632 = vmax.f32 %v511, 0.0
  %v633 = vmax.f32 %v514, 0.0
  %v634 = vmax.f32 %v519, 0.0
  %v635 = vmax.f32 %v522, 0.0
  %v636 = vmax.f32 %v527, 0.0
  %v637 = vmax.f32 %v530, 0.0
  %v638 = vmax.f32 %v535, 0.0
  %v639 = vmax.f32 %v538, 0.0
  %v640 = vmax.f32 %v543, 0.0
  %v641 = vmax.f32 %v546, 0.0
  %v642 = vmax.f32 %v551, 0.0
  %v643 = vmax.f32 %v554, 0.0
  %v644 = vmax.f32 %v559, 0.0
  %v645 = vmax.f32 %v562, 0.0
  %v646 = vmax.f32 %v567, 0.0
  %v647 = vmax.f32 %v570, 0.0
  %v648 = vmax.f32 %v575, 0.0
  %v649 = vmax.f32 %v578, 0.0
  %v650 = vmax.f32 %v583, 0.0
  %v651 = vmax.f32 %v586, 0.0
  %v652 = vmax.f32 %v591, 0.0
  %v653 = vpack.c.bf16 %v597, %v596
  %v654 = vpack.c.bf16 %v599, %v598
  %v655 = vpack.c.bf16 %v601, %v600
  %v656 = vpack.c.bf16 %v603, %v602
  %v657 = vpack.c.bf16 %v605, %v604
  %v658 = vpack.c.bf16 %v607, %v606
  %v659 = vpack.c.bf16 %v609, %v608
  %v660 = vpack.c.bf16 %v611, %v610
  %v661 = vpack.c.bf16 %v613, %v612
  %v662 = vpack.c.bf16 %v615, %v614
  %v663 = vpack.c.bf16 %v617, %v616
  %v664 = vpack.c.bf16 %v619, %v618
  %v665 = vpack.c.bf16 %v621, %v620
  %v666 = vpack.c.bf16 %v623, %v622
  %v667 = vpack.c.bf16 %v625, %v624
  %v668 = vpack.c.bf16 %v627, %v626
  %v669 = vpack.c.bf16 %v629, %v628
  %v670 = vpack.c.bf16 %v631, %v630
  %v671 = vpack.c.bf16 %v633, %v632
  %v672 = vpack.c.bf16 %v635, %v634
  %v673 = vpack.c.bf16 %v637, %v636
  %v674 = vpack.c.bf16 %v639, %v638
  %v675 = vpack.c.bf16 %v641, %v640
  %v676 = vpack.c.bf16 %v643, %v642
  %v677 = vpack.c.bf16 %v645, %v644
  %v678 = vpack.c.bf16 %v647, %v646
  %v679 = vpack.c.bf16 %v649, %v648
  %v680 = vpack.c.bf16 %v651, %v650
  %v681 = vpack.c.bf16 %v652, %v652
  %v711 = vunpack.c.l.b16 %v653
  %v712 = vunpack.c.h.b16 %v653
  %v713 = vunpack.c.l.b16 %v654
  %v714 = vunpack.c.h.b16 %v654
  %v715 = vunpack.c.l.b16 %v655
  %v716 = vunpack.c.h.b16 %v655
  %v717 = vunpack.c.l.b16 %v656
  %v718 = vunpack.c.h.b16 %v656
  %v719 = vunpack.c.l.b16 %v657
  %v720 = vunpack.c.h.b16 %v657
  %v721 = vunpack.c.l.b16 %v658
  %v722 = vunpack.c.h.b16 %v658
  %v723 = vunpack.c.l.b16 %v659
  %v724 = vunpack.c.h.b16 %v659
  %v725 = vunpack.c.l.b16 %v660
  %v726 = vunpack.c.h.b16 %v660
  %v727 = vunpack.c.l.b16 %v661
  %v728 = vunpack.c.h.b16 %v661
  %v729 = vunpack.c.l.b16 %v662
  %v730 = vunpack.c.h.b16 %v662
  %v731 = vunpack.c.l.b16 %v663
  %v732 = vunpack.c.h.b16 %v663
  %v733 = vunpack.c.l.b16 %v664
  %v734 = vunpack.c.h.b16 %v664
  %v735 = vunpack.c.l.b16 %v665
  %v736 = vunpack.c.h.b16 %v665
  %v737 = vunpack.c.l.b16 %v666
  %v738 = vunpack.c.h.b16 %v666
  %v739 = vunpack.c.l.b16 %v667
  %v740 = vunpack.c.h.b16 %v667
  %v741 = vunpack.c.l.b16 %v668
  %v742 = vunpack.c.h.b16 %v668
  %v743 = vunpack.c.l.b16 %v669
  %v744 = vunpack.c.h.b16 %v669
  %v745 = vunpack.c.l.b16 %v670
  %v746 = vunpack.c.h.b16 %v670
  %v747 = vunpack.c.l.b16 %v671
  %v748 = vunpack.c.h.b16 %v671
  %v749 = vunpack.c.l.b16 %v672
  %v750 = vunpack.c.h.b16 %v672
  %v751 = vunpack.c.l.b16 %v673
  %v752 = vunpack.c.h.b16 %v673
  %v753 = vunpack.c.l.b16 %v674
  %v754 = vunpack.c.h.b16 %v674
  %v755 = vunpack.c.l.b16 %v675
  %v756 = vunpack.c.h.b16 %v675
  %v757 = vunpack.c.l.b16 %v676
  %v758 = vunpack.c.h.b16 %v676
  %v759 = vunpack.c.l.b16 %v677
  %v760 = vunpack.c.h.b16 %v677
  %v761 = vunpack.c.l.b16 %v678
  %v762 = vunpack.c.h.b16 %v678
  %v763 = vunpack.c.l.b16 %v679
  %v764 = vunpack.c.h.b16 %v679
  %v765 = vunpack.c.l.b16 %v680
  %v766 = vunpack.c.h.b16 %v680
  %v767 = vunpack.c.l.b16 %v681
  %v768 = vpack.c.b16 %v711, %v711
  %v769 = vpack.c.b16 %v712, %v712
  %v770 = vpack.c.b16 %v713, %v713
  %v771 = vpack.c.b16 %v714, %v714
  %v772 = vpack.c.b16 %v715, %v715
  %v773 = vpack.c.b16 %v716, %v716
  %v774 = vpack.c.b16 %v717, %v717
  %v775 = vpack.c.b16 %v718, %v718
  %v776 = vpack.c.b16 %v719, %v719
  %v777 = vpack.c.b16 %v720, %v720
  %v778 = vpack.c.b16 %v721, %v721
  %v779 = vpack.c.b16 %v722, %v722
  %v780 = vpack.c.b16 %v723, %v723
  %v781 = vpack.c.b16 %v724, %v724
  %v782 = vpack.c.b16 %v725, %v725
  %v783 = vpack.c.b16 %v726, %v726
  %v784 = vpack.c.b16 %v727, %v727
  %v785 = vpack.c.b16 %v728, %v728
  %v786 = vpack.c.b16 %v729, %v729
  %v787 = vpack.c.b16 %v730, %v730
  %v788 = vpack.c.b16 %v731, %v731
  %v789 = vpack.c.b16 %v732, %v732
  %v790 = vpack.c.b16 %v733, %v733
  %v791 = vpack.c.b16 %v734, %v734
  %v792 = vpack.c.b16 %v735, %v735
  %v793 = vpack.c.b16 %v736, %v736
  %v794 = vpack.c.b16 %v737, %v737
  %v795 = vpack.c.b16 %v738, %v738
  %v796 = vpack.c.b16 %v739, %v739
  %v797 = vpack.c.b16 %v740, %v740
  %v798 = vpack.c.b16 %v741, %v741
  %v799 = vpack.c.b16 %v742, %v742
  %v800 = vpack.c.b16 %v743, %v743
  %v801 = vpack.c.b16 %v744, %v744
  %v802 = vpack.c.b16 %v745, %v745
  %v803 = vpack.c.b16 %v746, %v746
  %v804 = vpack.c.b16 %v747, %v747
  %v805 = vpack.c.b16 %v748, %v748
  %v806 = vpack.c.b16 %v749, %v749
  %v807 = vpack.c.b16 %v750, %v750
  %v808 = vpack.c.b16 %v751, %v751
  %v809 = vpack.c.b16 %v752, %v752
  %v810 = vpack.c.b16 %v753, %v753
  %v811 = vpack.c.b16 %v754, %v754
  %v812 = vpack.c.b16 %v755, %v755
  %v813 = vpack.c.b16 %v756, %v756
  %v814 = vpack.c.b16 %v757, %v757
  %v815 = vpack.c.b16 %v758, %v758
  %v816 = vpack.c.b16 %v759, %v759
  %v817 = vpack.c.b16 %v760, %v760
  %v818 = vpack.c.b16 %v761, %v761
  %v819 = vpack.c.b16 %v762, %v762
  %v820 = vpack.c.b16 %v763, %v763
  %v821 = vpack.c.b16 %v764, %v764
  %v822 = vpack.c.b16 %v765, %v765
  %v823 = vpack.c.b16 %v766, %v766
  %v824 = vpack.c.b16 %v767, %v767
  %vm882 = vcmask 257024
  %883 = vst.msk [vmem:[%s3] sm:$0xf] %vm882, %v768
  %884 = vst.msk [vmem:[%s3 + $0x4] sm:$0xf] %vm882, %v769
  %885 = vst.msk [vmem:[%s3 + $0x8] sm:$0xf] %vm882, %v770
  %886 = vst.msk [vmem:[%s3 + $0xc] sm:$0xf] %vm882, %v771
  %887 = vst.msk [vmem:[%s3 + $0x10] sm:$0xf] %vm882, %v772
  %888 = vst.msk [vmem:[%s3 + $0x14] sm:$0xf] %vm882, %v773
  %889 = vst.msk [vmem:[%s3 + $0x18] sm:$0xf] %vm882, %v774
  %890 = vst.msk [vmem:[%s3 + $0x1c] sm:$0xf] %vm882, %v775
  %891 = vst.msk [vmem:[%s3 + $0x20] sm:$0xf] %vm882, %v776
  %892 = vst.msk [vmem:[%s3 + $0x24] sm:$0xf] %vm882, %v777
  %893 = vst.msk [vmem:[%s3 + $0x28] sm:$0xf] %vm882, %v778
  %894 = vst.msk [vmem:[%s3 + $0x2c] sm:$0xf] %vm882, %v779
  %895 = vst.msk [vmem:[%s3 + $0x30] sm:$0xf] %vm882, %v780
  %896 = vst.msk [vmem:[%s3 + $0x34] sm:$0xf] %vm882, %v781
  %897 = vst.msk [vmem:[%s3 + $0x38] sm:$0xf] %vm882, %v782
  %898 = vst.msk [vmem:[%s3 + $0x3c] sm:$0xf] %vm882, %v783
  %899 = vst.msk [vmem:[%s3 + $0x40] sm:$0xf] %vm882, %v784
  %900 = vst.msk [vmem:[%s3 + $0x44] sm:$0xf] %vm882, %v785
  %901 = vst.msk [vmem:[%s3 + $0x48] sm:$0xf] %vm882, %v786
  %902 = vst.msk [vmem:[%s3 + $0x4c] sm:$0xf] %vm882, %v787
  %903 = vst.msk [vmem:[%s3 + $0x50] sm:$0xf] %vm882, %v788
  %904 = vst.msk [vmem:[%s3 + $0x54] sm:$0xf] %vm882, %v789
  %905 = vst.msk [vmem:[%s3 + $0x58] sm:$0xf] %vm882, %v790
  %906 = vst.msk [vmem:[%s3 + $0x5c] sm:$0xf] %vm882, %v791
  %907 = vst.msk [vmem:[%s3 + $0x60] sm:$0xf] %vm882, %v792
  %908 = vst.msk [vmem:[%s3 + $0x64] sm:$0xf] %vm882, %v793
  %909 = vst.msk [vmem:[%s3 + $0x68] sm:$0xf] %vm882, %v794
  %910 = vst.msk [vmem:[%s3 + $0x6c] sm:$0xf] %vm882, %v795
  %911 = vst.msk [vmem:[%s3 + $0x70] sm:$0xf] %vm882, %v796
  %912 = vst.msk [vmem:[%s3 + $0x74] sm:$0xf] %vm882, %v797
  %913 = vst.msk [vmem:[%s3 + $0x78] sm:$0xf] %vm882, %v798
  %914 = vst.msk [vmem:[%s3 + $0x7c] sm:$0xf] %vm882, %v799
  %915 = vst.msk [vmem:[%s3 + $0x80] sm:$0xf] %vm882, %v800
  %916 = vst.msk [vmem:[%s3 + $0x84] sm:$0xf] %vm882, %v801
  %917 = vst.msk [vmem:[%s3 + $0x88] sm:$0xf] %vm882, %v802
  %918 = vst.msk [vmem:[%s3 + $0x8c] sm:$0xf] %vm882, %v803
  %919 = vst.msk [vmem:[%s3 + $0x90] sm:$0xf] %vm882, %v804
  %920 = vst.msk [vmem:[%s3 + $0x94] sm:$0xf] %vm882, %v805
  %921 = vst.msk [vmem:[%s3 + $0x98] sm:$0xf] %vm882, %v806
  %922 = vst.msk [vmem:[%s3 + $0x9c] sm:$0xf] %vm882, %v807
  %923 = vst.msk [vmem:[%s3 + $0xa0] sm:$0xf] %vm882, %v808
  %924 = vst.msk [vmem:[%s3 + $0xa4] sm:$0xf] %vm882, %v809
  %925 = vst.msk [vmem:[%s3 + $0xa8] sm:$0xf] %vm882, %v810
  %926 = vst.msk [vmem:[%s3 + $0xac] sm:$0xf] %vm882, %v811
  %927 = vst.msk [vmem:[%s3 + $0xb0] sm:$0xf] %vm882, %v812
  %928 = vst.msk [vmem:[%s3 + $0xb4] sm:$0xf] %vm882, %v813
  %929 = vst.msk [vmem:[%s3 + $0xb8] sm:$0xf] %vm882, %v814
  %930 = vst.msk [vmem:[%s3 + $0xbc] sm:$0xf] %vm882, %v815
  %931 = vst.msk [vmem:[%s3 + $0xc0] sm:$0xf] %vm882, %v816
  %932 = vst.msk [vmem:[%s3 + $0xc4] sm:$0xf] %vm882, %v817
  %933 = vst.msk [vmem:[%s3 + $0xc8] sm:$0xf] %vm882, %v818
  %934 = vst.msk [vmem:[%s3 + $0xcc] sm:$0xf] %vm882, %v819
  %935 = vst.msk [vmem:[%s3 + $0xd0] sm:$0xf] %vm882, %v820
  %936 = vst.msk [vmem:[%s3 + $0xd4] sm:$0xf] %vm882, %v821
  %937 = vst.msk [vmem:[%s3 + $0xd8] sm:$0xf] %vm882, %v822
  %938 = vst.msk [vmem:[%s3 + $0xdc] sm:$0xf] %vm882, %v823
  %vm939 = vcmask 253952
  %940 = vst.msk [vmem:[%s3 + $0xe0] sm:$0x1] %vm939, %v824
  // Predicated region
  $region14: #{tpu_custom_call.1} parent=0 // pred_check
    _
  $region15: #{tpu_custom_call.1} parent=0 // pred_check_branch
    %942 = sbr.rel (0) target = $region17
  $region16: #{tpu_custom_call.1} parent=0 // pred_region
    _
  $region17: #{tpu_custom_call.1} parent=0 // pred_fallthru
    _
  // Predicated region
  $region18: #{tpu_custom_call.1} parent=0 // pred_check
    _
  $region19: #{tpu_custom_call.1} parent=0 // pred_check_branch
    %944 = sbr.rel (0) target = $region21
  $region20: #{tpu_custom_call.1} parent=0 // pred_region
    _
  $region21: #{tpu_custom_call.1} parent=0 // pred_fallthru
    _

</llo_original>
